<compile_context>
chip_gen: v5e
topology: v5e:2x2
jax: 0.10.0
libtpu: 0.0.40
codegen_flags: <defaults>
</compile_context>

<pallas_src>
import numpy as np
import jax
import jax.numpy as jnp
from jax import lax
from jax.experimental import pallas as pl
from jax.experimental.pallas import tpu as pltpu  # noqa: F401  (TPU backend)

# ---------------- model config (small, consistent with the module) ----------
HIDDEN = 64
NUM_HEADS = 4
NUM_KV_HEADS = 2
HEAD_DIM = HIDDEN // NUM_HEADS          # 16
Q_SIZE = NUM_HEADS * HEAD_DIM           # 64
KV_SIZE = NUM_KV_HEADS * HEAD_DIM       # 32
QK_SIZE = Q_SIZE + KV_SIZE              # 96
SEQ = 8
ROPE_THETA = 10000.0
SCALE = HEAD_DIM ** -0.5
EPS = 1e-5
GROUP = NUM_HEADS // NUM_KV_HEADS


# ---------------- config-only structural constants (built once at import) ----
def _build_avg_swap(num_heads_total):
    """Block-diagonal per-head averaging matrix and per-head half-swap
    permutation, both [n*hd, n*hd].  Config-only -> computed once."""
    blk_avg = np.ones((HEAD_DIM, HEAD_DIM), np.float32) / HEAD_DIM
    avg = np.kron(np.eye(num_heads_total, dtype=np.float32), blk_avg)
    half = HEAD_DIM // 2
    z = np.zeros((half, half), np.float32)
    i = np.eye(half, dtype=np.float32)
    blk_swap = np.block([[z, i], [i, z]])
    swap = np.kron(np.eye(num_heads_total, dtype=np.float32), blk_swap)
    return avg, swap


_AVG_QK, _SWAP_QK = _build_avg_swap(NUM_HEADS + NUM_KV_HEADS)   # [96, 96] each


# ---------------- fused kernel ----------------------------------------------
def _chameleon_attn_kernel(x_ref, w_qkv_ref, w_o_ref,
                           wcos_ref, wsin_ref, bias_ref,
                           avg_ref, swap_ref, o_ref):
    x = x_ref[...]                                                  # [T, 64]
    T = x.shape[0]

    # 1) QKV projection (single MXU matmul); lanes = [ q 64 | k 32 | v 32 ].
    qkv = jnp.dot(x, w_qkv_ref[...], preferred_element_type=jnp.float32)
    qk = qkv[:, :QK_SIZE]                                           # [T, 96]
    v = qkv[:, QK_SIZE:]                                            # [T, 32]

    # 2) joint per-head LayerNorm + neox RoPE on the fused q|k slab.
    #    LayerNorm affine (w, b) and the attention SCALE are pre-folded into
    #    wcos / wsin / bias, so this is just stats + one FMA chain.
    avg = avg_ref[...]
    mean = jnp.dot(qk, avg, preferred_element_type=jnp.float32)     # per-head mean
    dev = qk - mean
    var = jnp.dot(dev * dev, avg, preferred_element_type=jnp.float32)
    xn = dev * lax.rsqrt(var + EPS)                                 # unit-normalized
    xs = jnp.dot(xn, swap_ref[...], preferred_element_type=jnp.float32)  # half-swap
    qk_rot = xn * wcos_ref[...] + xs * wsin_ref[...] + bias_ref[...]
    q = qk_rot[:, :Q_SIZE]                                          # [T, 64] (* SCALE)
    k = qk_rot[:, Q_SIZE:]                                          # [T, 32]

    # 3) causal GQA attention + per-head o_proj accumulation (no lane concat).
    row = lax.broadcasted_iota(jnp.int32, (T, T), 0)
    col = lax.broadcasted_iota(jnp.int32, (T, T), 1)
    causal = col <= row
    w_o = w_o_ref[...]                                              # [64, 64]
    acc = jnp.zeros((T, HIDDEN), jnp.float32)
    trans_b = (((1,), (1,)), ((), ()))                              # A @ B^T, no relayout
    for g in range(NUM_KV_HEADS):
        kh = k[:, g * HEAD_DIM:(g + 1) * HEAD_DIM]                  # shared by GROUP q heads
        vh = v[:, g * HEAD_DIM:(g + 1) * HEAD_DIM]
        for j in range(GROUP):
            h = g * GROUP + j
            qh = q[:, h * HEAD_DIM:(h + 1) * HEAD_DIM]
            s = lax.dot_general(qh, kh, trans_b,
                                preferred_element_type=jnp.float32)  # [T, T]
            s = jnp.where(causal, s, -1e30)
            m = jnp.max(s, axis=-1, keepdims=True)
            p = jnp.exp(s - m)
            denom = jnp.sum(p, axis=-1, keepdims=True)
            pv = jnp.dot(p, vh, preferred_element_type=jnp.float32)  # [T, hd]
            pv = pv * pl.reciprocal(denom, approx=True)
            acc = acc + jnp.dot(pv, w_o[h * HEAD_DIM:(h + 1) * HEAD_DIM, :],
                                preferred_element_type=jnp.float32)
    o_ref[...] = acc


# ---------------- table folding (runs inside jit, fused by XLA) --------------
def _fold_tables(positions, w, b, scale):
    """Fold per-head LayerNorm affine + neox RoPE + scale into lane tables.

    Returns wcos, wsin, bias of shape [T, nh*hd] such that
        rope(xn * w + b) * scale == xn * wcos + half_swap(xn) * wsin + bias
    where xn is the unit LayerNorm output and half_swap swaps the two halves
    within each head.
    """
    nh = w.shape[0]
    half = HEAD_DIM // 2
    inv_freq = 1.0 / (ROPE_THETA ** (
        jnp.arange(0, HEAD_DIM, 2, dtype=jnp.float32) / HEAD_DIM))
    freqs = positions.astype(jnp.float32)[:, None] * inv_freq[None, :]   # [T, hd/2]
    cos = jnp.cos(freqs)
    sin = jnp.sin(freqs)
    cos_full = jnp.tile(jnp.concatenate([cos, cos], axis=-1), (1, nh))        # [T, nh*hd]
    sin_signed = jnp.tile(jnp.concatenate([-sin, sin], axis=-1), (1, nh))     # [T, nh*hd]
    w_flat = w.reshape(1, nh * HEAD_DIM)
    b_flat = b.reshape(1, nh * HEAD_DIM)
    w_swap = jnp.concatenate([w[:, half:], w[:, :half]], axis=-1).reshape(1, nh * HEAD_DIM)
    b_swap = jnp.concatenate([b[:, half:], b[:, :half]], axis=-1).reshape(1, nh * HEAD_DIM)
    wcos = w_flat * cos_full * scale
    wsin = w_swap * sin_signed * scale
    bias = (b_flat * cos_full + b_swap * sin_signed) * scale
    return wcos, wsin, bias


# ---------------- full forward ------------------------------------------------
@jax.jit
def chameleon_attention_forward(positions, hidden_states, params):
    T = hidden_states.shape[0]
    q_wcos, q_wsin, q_bias = _fold_tables(
        positions, params["q_norm_w"], params["q_norm_b"], SCALE)
    k_wcos, k_wsin, k_bias = _fold_tables(
        positions, params["k_norm_w"], params["k_norm_b"], 1.0)
    wcos = jnp.concatenate([q_wcos, k_wcos], axis=-1)    # [T, 96]
    wsin = jnp.concatenate([q_wsin, k_wsin], axis=-1)    # [T, 96]
    bias = jnp.concatenate([q_bias, k_bias], axis=-1)    # [T, 96]

    return pl.pallas_call(
        _chameleon_attn_kernel,
        out_shape=jax.ShapeDtypeStruct((T, HIDDEN), jnp.float32),
    )(hidden_states, params["w_qkv"], params["w_o"],
      wcos, wsin, bias, _AVG_QK, _SWAP_QK)


# ---------------- pure-JAX reference (for correctness) ------------------------
def reference_forward(positions, hidden_states, params):
    T = hidden_states.shape[0]
    qkv = hidden_states @ params["w_qkv"]
    q, k, v = jnp.split(qkv, [Q_SIZE, Q_SIZE + KV_SIZE], axis=-1)

    def ln(x, w, b, nh):
        x = x.reshape(T, nh, HEAD_DIM)
        mean = jnp.mean(x, axis=-1, keepdims=True)
        var = jnp.mean(jnp.square(x - mean), axis=-1, keepdims=True)
        xn = (x - mean) / jnp.sqrt(var + EPS)
        return xn * w[None] + b[None]

    half = HEAD_DIM // 2
    inv_freq = 1.0 / (ROPE_THETA ** (
        jnp.arange(0, HEAD_DIM, 2, dtype=jnp.float32) / HEAD_DIM))
    freqs = positions.astype(jnp.float32)[:, None] * inv_freq[None, :]
    cos, sin = jnp.cos(freqs), jnp.sin(freqs)

    def rope(x):
        x1, x2 = x[..., :half], x[..., half:]
        c, s = cos[:, None, :], sin[:, None, :]
        return jnp.concatenate([x1 * c - x2 * s, x2 * c + x1 * s], axis=-1)

    q3 = rope(ln(q, params["q_norm_w"], params["q_norm_b"], NUM_HEADS))
    k3 = rope(ln(k, params["k_norm_w"], params["k_norm_b"], NUM_KV_HEADS))
    v3 = v.reshape(T, NUM_KV_HEADS, HEAD_DIM)
    k3 = jnp.repeat(k3, GROUP, axis=1)
    v3 = jnp.repeat(v3, GROUP, axis=1)
    s = jnp.einsum("qhd,khd->hqk", q3, k3) * SCALE
    mask = jnp.tril(jnp.ones((T, T), dtype=bool))
    s = jnp.where(mask[None], s, -1e30)
    p = jax.nn.softmax(s, axis=-1)
    o = jnp.einsum("hqk,khd->qhd", p, v3).reshape(T, Q_SIZE)
    return o @ params["w_o"]


# ---------------- main ---------------------------------------------------------
if __name__ == "__main__":
    key = jax.random.PRNGKey(0)
    ks = jax.random.split(key, 8)
    params = {
        "w_qkv": 0.02 * jax.random.normal(ks[0], (HIDDEN, Q_SIZE + 2 * KV_SIZE),
                                          jnp.float32),
        "w_o": 0.02 * jax.random.normal(ks[1], (Q_SIZE, HIDDEN), jnp.float32),
        "q_norm_w": 1.0 + 0.1 * jax.random.normal(ks[2], (NUM_HEADS, HEAD_DIM),
                                                  jnp.float32),
        "q_norm_b": 0.1 * jax.random.normal(ks[3], (NUM_HEADS, HEAD_DIM),
                                            jnp.float32),
        "k_norm_w": 1.0 + 0.1 * jax.random.normal(ks[4], (NUM_KV_HEADS, HEAD_DIM),
                                                  jnp.float32),
        "k_norm_b": 0.1 * jax.random.normal(ks[5], (NUM_KV_HEADS, HEAD_DIM),
                                            jnp.float32),
    }
    hidden_states = jax.random.normal(ks[6], (SEQ, HIDDEN), jnp.float32)
    positions = jnp.arange(SEQ, dtype=jnp.int32)

    out = chameleon_attention_forward(positions, hidden_states, params)
    out = jax.block_until_ready(out)

    ref = reference_forward(positions, hidden_states, params)
    assert out.shape == (SEQ, HIDDEN)
    assert jnp.allclose(out, ref, atol=1e-2, rtol=1e-2), "mismatch vs reference"

    print("KERNEL_OK")
</pallas_src>

<mosaic_0001>
module attributes {stable_mosaic.version = 11 : i64} {
  func.func @_chameleon_attn_kernel(%arg0: memref<8x64xf32, #tpu.memory_space<vmem>>, %arg1: memref<64x128xf32, #tpu.memory_space<vmem>>, %arg2: memref<64x64xf32, #tpu.memory_space<vmem>>, %arg3: memref<8x96xf32, #tpu.memory_space<vmem>>, %arg4: memref<8x96xf32, #tpu.memory_space<vmem>>, %arg5: memref<8x96xf32, #tpu.memory_space<vmem>>, %arg6: memref<96x96xf32, #tpu.memory_space<vmem>>, %arg7: memref<96x96xf32, #tpu.memory_space<vmem>>, %arg8: memref<8x64xf32, #tpu.memory_space<vmem>>) attributes {dimension_semantics = [], scalar_prefetch = 0 : i64, scratch_operands = 0 : i64, tpu.core_type = #tpu.core_type<tc>} {
    %c0 = arith.constant 0 : index
    %c0_0 = arith.constant 0 : index
    %0 = vector.load %arg0[%c0, %c0_0] : memref<8x64xf32, #tpu.memory_space<vmem>>, vector<8x64xf32>
    %c0_1 = arith.constant 0 : index
    %c0_2 = arith.constant 0 : index
    %1 = vector.load %arg1[%c0_1, %c0_2] : memref<64x128xf32, #tpu.memory_space<vmem>>, vector<64x128xf32>
    %cst = arith.constant dense<0.000000e+00> : vector<8x128xf32>
    %2 = tpu.matmul %0, %1, %cst {dimension_numbers = #tpu.dot_dimension_numbers<[1], [0], [0], [1], [0, 0, 1, 1], [], []>} : vector<8x64xf32>, vector<64x128xf32>, vector<8x128xf32> -> vector<8x128xf32>
    %3 = vector.extract_strided_slice %2 {offsets = [0, 0], sizes = [8, 96], strides = [1, 1]} : vector<8x128xf32> to vector<8x96xf32>
    %4 = vector.extract_strided_slice %2 {offsets = [0, 96], sizes = [8, 32], strides = [1, 1]} : vector<8x128xf32> to vector<8x32xf32>
    %c0_3 = arith.constant 0 : index
    %c0_4 = arith.constant 0 : index
    %5 = vector.load %arg6[%c0_3, %c0_4] : memref<96x96xf32, #tpu.memory_space<vmem>>, vector<96x96xf32>
    %cst_5 = arith.constant dense<0.000000e+00> : vector<8x96xf32>
    %6 = tpu.matmul %3, %5, %cst_5 {dimension_numbers = #tpu.dot_dimension_numbers<[1], [0], [0], [1], [0, 0, 1, 1], [], []>} : vector<8x96xf32>, vector<96x96xf32>, vector<8x96xf32> -> vector<8x96xf32>
    %7 = arith.subf %3, %6 : vector<8x96xf32>
    %8 = arith.mulf %7, %7 : vector<8x96xf32>
    %cst_6 = arith.constant dense<0.000000e+00> : vector<8x96xf32>
    %9 = tpu.matmul %8, %5, %cst_6 {dimension_numbers = #tpu.dot_dimension_numbers<[1], [0], [0], [1], [0, 0, 1, 1], [], []>} : vector<8x96xf32>, vector<96x96xf32>, vector<8x96xf32> -> vector<8x96xf32>
    %cst_7 = arith.constant 9.99999974E-6 : f32
    %10 = vector.broadcast %cst_7 : f32 to vector<8x96xf32>
    %11 = arith.addf %9, %10 : vector<8x96xf32>
    %12 = math.rsqrt %11 : vector<8x96xf32>
    %13 = arith.mulf %7, %12 : vector<8x96xf32>
    %c0_8 = arith.constant 0 : index
    %c0_9 = arith.constant 0 : index
    %14 = vector.load %arg7[%c0_8, %c0_9] : memref<96x96xf32, #tpu.memory_space<vmem>>, vector<96x96xf32>
    %cst_10 = arith.constant dense<0.000000e+00> : vector<8x96xf32>
    %15 = tpu.matmul %13, %14, %cst_10 {dimension_numbers = #tpu.dot_dimension_numbers<[1], [0], [0], [1], [0, 0, 1, 1], [], []>} : vector<8x96xf32>, vector<96x96xf32>, vector<8x96xf32> -> vector<8x96xf32>
    %c0_11 = arith.constant 0 : index
    %c0_12 = arith.constant 0 : index
    %16 = vector.load %arg3[%c0_11, %c0_12] : memref<8x96xf32, #tpu.memory_space<vmem>>, vector<8x96xf32>
    %17 = arith.mulf %13, %16 : vector<8x96xf32>
    %c0_13 = arith.constant 0 : index
    %c0_14 = arith.constant 0 : index
    %18 = vector.load %arg4[%c0_13, %c0_14] : memref<8x96xf32, #tpu.memory_space<vmem>>, vector<8x96xf32>
    %19 = arith.mulf %15, %18 : vector<8x96xf32>
    %20 = arith.addf %17, %19 : vector<8x96xf32>
    %c0_15 = arith.constant 0 : index
    %c0_16 = arith.constant 0 : index
    %21 = vector.load %arg5[%c0_15, %c0_16] : memref<8x96xf32, #tpu.memory_space<vmem>>, vector<8x96xf32>
    %22 = arith.addf %20, %21 : vector<8x96xf32>
    %23 = vector.extract_strided_slice %22 {offsets = [0, 0], sizes = [8, 64], strides = [1, 1]} : vector<8x96xf32> to vector<8x64xf32>
    %24 = vector.extract_strided_slice %22 {offsets = [0, 64], sizes = [8, 32], strides = [1, 1]} : vector<8x96xf32> to vector<8x32xf32>
    %25 = tpu.iota {dimensions = array<i32: 0>} : vector<8x8xi32>
    %26 = tpu.iota {dimensions = array<i32: 1>} : vector<8x8xi32>
    %27 = arith.cmpi sle, %26, %25 : vector<8x8xi32>
    %c0_17 = arith.constant 0 : index
    %c0_18 = arith.constant 0 : index
    %28 = vector.load %arg2[%c0_17, %c0_18] : memref<64x64xf32, #tpu.memory_space<vmem>>, vector<64x64xf32>
    %cst_19 = arith.constant 0.000000e+00 : f32
    %29 = vector.broadcast %cst_19 : f32 to vector<8x64xf32>
    %30 = vector.extract_strided_slice %24 {offsets = [0, 0], sizes = [8, 16], strides = [1, 1]} : vector<8x32xf32> to vector<8x16xf32>
    %31 = vector.extract_strided_slice %4 {offsets = [0, 0], sizes = [8, 16], strides = [1, 1]} : vector<8x32xf32> to vector<8x16xf32>
    %32 = vector.extract_strided_slice %23 {offsets = [0, 0], sizes = [8, 16], strides = [1, 1]} : vector<8x64xf32> to vector<8x16xf32>
    %cst_20 = arith.constant dense<0.000000e+00> : vector<8x8xf32>
    %33 = tpu.matmul %32, %30, %cst_20 {dimension_numbers = #tpu.dot_dimension_numbers<[1], [1], [0], [0], [0, 0, 1, 0], [], []>} : vector<8x16xf32>, vector<8x16xf32>, vector<8x8xf32> -> vector<8x8xf32>
    %cst_21 = arith.constant -1.000000e+30 : f32
    %34 = vector.broadcast %cst_21 : f32 to vector<8x8xf32>
    %35 = arith.select %27, %33, %34 : vector<8x8xi1>, vector<8x8xf32>
    %cst_22 = arith.constant dense<0xFF800000> : vector<8xf32>
    %36 = vector.multi_reduction <maximumf>, %35, %cst_22 [1] : vector<8x8xf32> to vector<8xf32>
    %37 = vector.shape_cast %36 : vector<8xf32> to vector<8x1xf32>
    %38 = vector.broadcast %37 : vector<8x1xf32> to vector<8x8xf32>
    %39 = arith.subf %35, %38 : vector<8x8xf32>
    %40 = math.exp %39 : vector<8x8xf32>
    %cst_23 = arith.constant dense<0.000000e+00> : vector<8xf32>
    %41 = vector.multi_reduction <add>, %40, %cst_23 [1] : vector<8x8xf32> to vector<8xf32>
    %42 = vector.shape_cast %41 : vector<8xf32> to vector<8x1xf32>
    %cst_24 = arith.constant dense<0.000000e+00> : vector<8x16xf32>
    %43 = tpu.matmul %40, %31, %cst_24 {dimension_numbers = #tpu.dot_dimension_numbers<[1], [0], [0], [1], [0, 0, 1, 1], [], []>} : vector<8x8xf32>, vector<8x16xf32>, vector<8x16xf32> -> vector<8x16xf32>
    %44 = tpu.reciprocal %42 {approx = true} : vector<8x1xf32> -> vector<8x1xf32>
    %45 = vector.broadcast %44 : vector<8x1xf32> to vector<8x16xf32>
    %46 = arith.mulf %43, %45 : vector<8x16xf32>
    %47 = vector.extract_strided_slice %28 {offsets = [0, 0], sizes = [16, 64], strides = [1, 1]} : vector<64x64xf32> to vector<16x64xf32>
    %cst_25 = arith.constant dense<0.000000e+00> : vector<8x64xf32>
    %48 = tpu.matmul %46, %47, %cst_25 {dimension_numbers = #tpu.dot_dimension_numbers<[1], [0], [0], [1], [0, 0, 1, 1], [], []>} : vector<8x16xf32>, vector<16x64xf32>, vector<8x64xf32> -> vector<8x64xf32>
    %49 = arith.addf %29, %48 : vector<8x64xf32>
    %50 = vector.extract_strided_slice %23 {offsets = [0, 16], sizes = [8, 16], strides = [1, 1]} : vector<8x64xf32> to vector<8x16xf32>
    %cst_26 = arith.constant dense<0.000000e+00> : vector<8x8xf32>
    %51 = tpu.matmul %50, %30, %cst_26 {dimension_numbers = #tpu.dot_dimension_numbers<[1], [1], [0], [0], [0, 0, 1, 0], [], []>} : vector<8x16xf32>, vector<8x16xf32>, vector<8x8xf32> -> vector<8x8xf32>
    %cst_27 = arith.constant -1.000000e+30 : f32
    %52 = vector.broadcast %cst_27 : f32 to vector<8x8xf32>
    %53 = arith.select %27, %51, %52 : vector<8x8xi1>, vector<8x8xf32>
    %cst_28 = arith.constant dense<0xFF800000> : vector<8xf32>
    %54 = vector.multi_reduction <maximumf>, %53, %cst_28 [1] : vector<8x8xf32> to vector<8xf32>
    %55 = vector.shape_cast %54 : vector<8xf32> to vector<8x1xf32>
    %56 = vector.broadcast %55 : vector<8x1xf32> to vector<8x8xf32>
    %57 = arith.subf %53, %56 : vector<8x8xf32>
    %58 = math.exp %57 : vector<8x8xf32>
    %cst_29 = arith.constant dense<0.000000e+00> : vector<8xf32>
    %59 = vector.multi_reduction <add>, %58, %cst_29 [1] : vector<8x8xf32> to vector<8xf32>
    %60 = vector.shape_cast %59 : vector<8xf32> to vector<8x1xf32>
    %cst_30 = arith.constant dense<0.000000e+00> : vector<8x16xf32>
    %61 = tpu.matmul %58, %31, %cst_30 {dimension_numbers = #tpu.dot_dimension_numbers<[1], [0], [0], [1], [0, 0, 1, 1], [], []>} : vector<8x8xf32>, vector<8x16xf32>, vector<8x16xf32> -> vector<8x16xf32>
    %62 = tpu.reciprocal %60 {approx = true} : vector<8x1xf32> -> vector<8x1xf32>
    %63 = vector.broadcast %62 : vector<8x1xf32> to vector<8x16xf32>
    %64 = arith.mulf %61, %63 : vector<8x16xf32>
    %65 = vector.extract_strided_slice %28 {offsets = [16, 0], sizes = [16, 64], strides = [1, 1]} : vector<64x64xf32> to vector<16x64xf32>
    %cst_31 = arith.constant dense<0.000000e+00> : vector<8x64xf32>
    %66 = tpu.matmul %64, %65, %cst_31 {dimension_numbers = #tpu.dot_dimension_numbers<[1], [0], [0], [1], [0, 0, 1, 1], [], []>} : vector<8x16xf32>, vector<16x64xf32>, vector<8x64xf32> -> vector<8x64xf32>
    %67 = arith.addf %49, %66 : vector<8x64xf32>
    %68 = vector.extract_strided_slice %24 {offsets = [0, 16], sizes = [8, 16], strides = [1, 1]} : vector<8x32xf32> to vector<8x16xf32>
    %69 = vector.extract_strided_slice %4 {offsets = [0, 16], sizes = [8, 16], strides = [1, 1]} : vector<8x32xf32> to vector<8x16xf32>
    %70 = vector.extract_strided_slice %23 {offsets = [0, 32], sizes = [8, 16], strides = [1, 1]} : vector<8x64xf32> to vector<8x16xf32>
    %cst_32 = arith.constant dense<0.000000e+00> : vector<8x8xf32>
    %71 = tpu.matmul %70, %68, %cst_32 {dimension_numbers = #tpu.dot_dimension_numbers<[1], [1], [0], [0], [0, 0, 1, 0], [], []>} : vector<8x16xf32>, vector<8x16xf32>, vector<8x8xf32> -> vector<8x8xf32>
    %cst_33 = arith.constant -1.000000e+30 : f32
    %72 = vector.broadcast %cst_33 : f32 to vector<8x8xf32>
    %73 = arith.select %27, %71, %72 : vector<8x8xi1>, vector<8x8xf32>
    %cst_34 = arith.constant dense<0xFF800000> : vector<8xf32>
    %74 = vector.multi_reduction <maximumf>, %73, %cst_34 [1] : vector<8x8xf32> to vector<8xf32>
    %75 = vector.shape_cast %74 : vector<8xf32> to vector<8x1xf32>
    %76 = vector.broadcast %75 : vector<8x1xf32> to vector<8x8xf32>
    %77 = arith.subf %73, %76 : vector<8x8xf32>
    %78 = math.exp %77 : vector<8x8xf32>
    %cst_35 = arith.constant dense<0.000000e+00> : vector<8xf32>
    %79 = vector.multi_reduction <add>, %78, %cst_35 [1] : vector<8x8xf32> to vector<8xf32>
    %80 = vector.shape_cast %79 : vector<8xf32> to vector<8x1xf32>
    %cst_36 = arith.constant dense<0.000000e+00> : vector<8x16xf32>
    %81 = tpu.matmul %78, %69, %cst_36 {dimension_numbers = #tpu.dot_dimension_numbers<[1], [0], [0], [1], [0, 0, 1, 1], [], []>} : vector<8x8xf32>, vector<8x16xf32>, vector<8x16xf32> -> vector<8x16xf32>
    %82 = tpu.reciprocal %80 {approx = true} : vector<8x1xf32> -> vector<8x1xf32>
    %83 = vector.broadcast %82 : vector<8x1xf32> to vector<8x16xf32>
    %84 = arith.mulf %81, %83 : vector<8x16xf32>
    %85 = vector.extract_strided_slice %28 {offsets = [32, 0], sizes = [16, 64], strides = [1, 1]} : vector<64x64xf32> to vector<16x64xf32>
    %cst_37 = arith.constant dense<0.000000e+00> : vector<8x64xf32>
    %86 = tpu.matmul %84, %85, %cst_37 {dimension_numbers = #tpu.dot_dimension_numbers<[1], [0], [0], [1], [0, 0, 1, 1], [], []>} : vector<8x16xf32>, vector<16x64xf32>, vector<8x64xf32> -> vector<8x64xf32>
    %87 = arith.addf %67, %86 : vector<8x64xf32>
    %88 = vector.extract_strided_slice %23 {offsets = [0, 48], sizes = [8, 16], strides = [1, 1]} : vector<8x64xf32> to vector<8x16xf32>
    %cst_38 = arith.constant dense<0.000000e+00> : vector<8x8xf32>
    %89 = tpu.matmul %88, %68, %cst_38 {dimension_numbers = #tpu.dot_dimension_numbers<[1], [1], [0], [0], [0, 0, 1, 0], [], []>} : vector<8x16xf32>, vector<8x16xf32>, vector<8x8xf32> -> vector<8x8xf32>
    %cst_39 = arith.constant -1.000000e+30 : f32
    %90 = vector.broadcast %cst_39 : f32 to vector<8x8xf32>
    %91 = arith.select %27, %89, %90 : vector<8x8xi1>, vector<8x8xf32>
    %cst_40 = arith.constant dense<0xFF800000> : vector<8xf32>
    %92 = vector.multi_reduction <maximumf>, %91, %cst_40 [1] : vector<8x8xf32> to vector<8xf32>
    %93 = vector.shape_cast %92 : vector<8xf32> to vector<8x1xf32>
    %94 = vector.broadcast %93 : vector<8x1xf32> to vector<8x8xf32>
    %95 = arith.subf %91, %94 : vector<8x8xf32>
    %96 = math.exp %95 : vector<8x8xf32>
    %cst_41 = arith.constant dense<0.000000e+00> : vector<8xf32>
    %97 = vector.multi_reduction <add>, %96, %cst_41 [1] : vector<8x8xf32> to vector<8xf32>
    %98 = vector.shape_cast %97 : vector<8xf32> to vector<8x1xf32>
    %cst_42 = arith.constant dense<0.000000e+00> : vector<8x16xf32>
    %99 = tpu.matmul %96, %69, %cst_42 {dimension_numbers = #tpu.dot_dimension_numbers<[1], [0], [0], [1], [0, 0, 1, 1], [], []>} : vector<8x8xf32>, vector<8x16xf32>, vector<8x16xf32> -> vector<8x16xf32>
    %100 = tpu.reciprocal %98 {approx = true} : vector<8x1xf32> -> vector<8x1xf32>
    %101 = vector.broadcast %100 : vector<8x1xf32> to vector<8x16xf32>
    %102 = arith.mulf %99, %101 : vector<8x16xf32>
    %103 = vector.extract_strided_slice %28 {offsets = [48, 0], sizes = [16, 64], strides = [1, 1]} : vector<64x64xf32> to vector<16x64xf32>
    %cst_43 = arith.constant dense<0.000000e+00> : vector<8x64xf32>
    %104 = tpu.matmul %102, %103, %cst_43 {dimension_numbers = #tpu.dot_dimension_numbers<[1], [0], [0], [1], [0, 0, 1, 1], [], []>} : vector<8x16xf32>, vector<16x64xf32>, vector<8x64xf32> -> vector<8x64xf32>
    %105 = arith.addf %87, %104 : vector<8x64xf32>
    %c0_44 = arith.constant 0 : index
    %c0_45 = arith.constant 0 : index
    %106 = vector.load %arg8[%c0_44, %c0_45] : memref<8x64xf32, #tpu.memory_space<vmem>>, vector<8x64xf32>
    tpu.vector_store %arg8[%c0_44, %c0_45], %105 {strides = array<i32>} : memref<8x64xf32, #tpu.memory_space<vmem>>, vector<8x64xf32>,
    return
  }
}

</mosaic_0001>

<llo_original>
// kernel: tile.29
$region0: #{tile.29}
  %s0 = inlined_call_operand.vmem [shape: f32[8,4,16], index: 0, kind: input, shape index: {}]
  %s1 = inlined_call_operand.vmem [shape: f32[8,64], index: 1, kind: output, shape index: {}]
  $region1: #{tile.29} parent=0
    #allocation0 [shape = 'u8[32768]{0}', space=vmem, size = 0x8000, scoped, tag = 'scoped mem for input reshape']
    %s3 = ssub.s32 16, 1
    %s4 = scalar_lea.vmem %s0, 28
    %v5 = vld [vmem:[%s4] sm:%s3]
    %s6 = scalar_lea.vmem [#allocation0], 56
    %7 = vst [vmem:[%s6] sm:%s3] %v5
    %s8 = scalar_lea.vmem %s0, 24
    %v9 = vld [vmem:[%s8] sm:%s3]
    %s10 = scalar_lea.vmem [#allocation0], 48
    %11 = vst [vmem:[%s10] sm:%s3] %v9
    %s12 = scalar_lea.vmem %s0, 20
    %v13 = vld [vmem:[%s12] sm:%s3]
    %s14 = scalar_lea.vmem [#allocation0], 40
    %15 = vst [vmem:[%s14] sm:%s3] %v13
    %s16 = scalar_lea.vmem %s0, 16
    %v17 = vld [vmem:[%s16] sm:%s3]
    %s18 = scalar_lea.vmem [#allocation0], 32
    %19 = vst [vmem:[%s18] sm:%s3] %v17
    %s20 = scalar_lea.vmem %s0, 12
    %v21 = vld [vmem:[%s20] sm:%s3]
    %s22 = scalar_lea.vmem [#allocation0], 24
    %23 = vst [vmem:[%s22] sm:%s3] %v21
    %s24 = scalar_lea.vmem %s0, 8
    %v25 = vld [vmem:[%s24] sm:%s3]
    %s26 = scalar_lea.vmem [#allocation0], 16
    %27 = vst [vmem:[%s26] sm:%s3] %v25
    %s28 = scalar_lea.vmem %s0, 4
    %v29 = vld [vmem:[%s28] sm:%s3]
    %s30 = scalar_lea.vmem [#allocation0], 8
    %31 = vst [vmem:[%s30] sm:%s3] %v29
    %v32 = vld [vmem:[%s0] sm:%s3]
    %33 = vst [vmem:[#allocation0] sm:%s3] %v32
    %v34 = vld [vmem:[#allocation0] ss:$8 sm:$0xf]
    %v35 = vld [vmem:[#allocation0] ss:$8 sm:$0xf0]
    %vm36 = vcmask 1047556
    %v37 = vsel %vm36, %v35, %v34
    %vm38 = vcmask 130048
    %39 = vst.msk [vmem:[%s1] sm:$0xff] %vm38, %v37
    %s40 = scalar_lea.vmem [#allocation0], 3
    %v41 = vld [vmem:[%s40] ss:$8 sm:$0xf]
    %s42 = scalar_lea.vmem [#allocation0], 3
    %v43 = vld [vmem:[%s42] ss:$8 sm:$0xf0]
    %vm44 = vcmask 1047556
    %v45 = vsel %vm44, %v43, %v41
    %46 = vrot.lane.b32.xlu0 %v45, 48
    %v47 = vpop.permute.xlu0 %46
    %vm48 = vcmask 523648
    %49 = vst.msk [vmem:[%s1] sm:$0xff] %vm48, %v47
    %s50 = scalar_lea.vmem [#allocation0], 2
    %v51 = vld [vmem:[%s50] ss:$8 sm:$0xf]
    %s52 = scalar_lea.vmem [#allocation0], 2
    %v53 = vld [vmem:[%s52] ss:$8 sm:$0xf0]
    %vm54 = vcmask 1047556
    %v55 = vsel %vm54, %v53, %v51
    %56 = vrot.lane.b32.xlu0 %v55, 32
    %v57 = vpop.permute.xlu0 %56
    %vm58 = vcmask 392448
    %59 = vst.msk [vmem:[%s1] sm:$0xff] %vm58, %v57
    %s60 = scalar_lea.vmem [#allocation0], 1
    %v61 = vld [vmem:[%s60] ss:$8 sm:$0xf]
    %s62 = scalar_lea.vmem [#allocation0], 1
    %v63 = vld [vmem:[%s62] ss:$8 sm:$0xf0]
    %vm64 = vcmask 1047556
    %v65 = vsel %vm64, %v63, %v61
    %66 = vrot.lane.b32.xlu0 %v65, 16
    %v67 = vpop.permute.xlu0 %66
    %vm68 = vcmask 261248
    %69 = vst.msk [vmem:[%s1] sm:$0xff] %vm68, %v67

// kernel: mul.65
$region0: #{mul.65}
  %s0 = inlined_call_operand.vmem [shape: f32[4,16], index: 0, kind: input, shape index: {}]
  %s1 = inlined_call_operand.vmem [shape: f32[64], index: 1, kind: output, shape index: {}]
  $region1: #{mul.65} parent=0
    #allocation0 [shape = 'u8[4096]{0}', space=vmem, size = 0x1000, scoped, tag = 'scoped mem for output reshape']
    #allocation1 [shape = 'u8[4096]{0}', space=vmem, size = 0x1000, scoped, tag = 'scoped mem for input reshape']
    %s3 = ssub.s32 16, 1
    %v4 = vld [vmem:[%s0] sm:%s3]
    %5 = vst [vmem:[#allocation1] sm:%s3] %v4
    %v6 = vld [vmem:[#allocation1] sm:$0x1]
    %vm7 = vcmask 130048
    %8 = vst.msk [vmem:[#allocation0] sm:$0x1] %vm7, %v6
    %s9 = scalar_lea.vmem [#allocation1], 3
    %v10 = vld [vmem:[%s9] sm:$0x1]
    %11 = vrot.lane.b32.xlu0 %v10, 48
    %v12 = vpop.permute.xlu0 %11
    %vm13 = vcmask 523648
    %14 = vst.msk [vmem:[#allocation0] sm:$0x1] %vm13, %v12
    %s15 = scalar_lea.vmem [#allocation1], 2
    %v16 = vld [vmem:[%s15] sm:$0x1]
    %17 = vrot.lane.b32.xlu0 %v16, 32
    %v18 = vpop.permute.xlu0 %17
    %vm19 = vcmask 392448
    %20 = vst.msk [vmem:[#allocation0] sm:$0x1] %vm19, %v18
    %s21 = scalar_lea.vmem [#allocation1], 1
    %v22 = vld [vmem:[%s21] sm:$0x1]
    %23 = vrot.lane.b32.xlu0 %v22, 16
    %v24 = vpop.permute.xlu0 %23
    %vm25 = vcmask 261248
    %26 = vst.msk [vmem:[#allocation0] sm:$0x1] %vm25, %v24
    %s28 = ssub.s32 2, 1
    %v29 = vld [vmem:[#allocation0] sm:%s28]
    %s31 = ssub.s32 2, 1
    %32 = vst [vmem:[%s1] sm:%s31] %v29

// kernel: tile.39
$region0: #{tile.39}
  %s0 = inlined_call_operand.vmem [shape: f32[8,2,16], index: 0, kind: input, shape index: {}]
  %s1 = inlined_call_operand.vmem [shape: f32[8,32], index: 1, kind: output, shape index: {}]
  $region1: #{tile.39} parent=0
    #allocation0 [shape = 'u8[32768]{0}', space=vmem, size = 0x8000, scoped, tag = 'scoped mem for input reshape']
    %s3 = ssub.s32 4, 1
    %s4 = scalar_lea.vmem %s0, 14
    %v5 = vld [vmem:[%s4] sm:%s3]
    %s6 = scalar_lea.vmem [#allocation0], 56
    %7 = vst [vmem:[%s6] sm:%s3] %v5
    %s8 = scalar_lea.vmem %s0, 12
    %v9 = vld [vmem:[%s8] sm:%s3]
    %s10 = scalar_lea.vmem [#allocation0], 48
    %11 = vst [vmem:[%s10] sm:%s3] %v9
    %s12 = scalar_lea.vmem %s0, 10
    %v13 = vld [vmem:[%s12] sm:%s3]
    %s14 = scalar_lea.vmem [#allocation0], 40
    %15 = vst [vmem:[%s14] sm:%s3] %v13
    %s16 = scalar_lea.vmem %s0, 8
    %v17 = vld [vmem:[%s16] sm:%s3]
    %s18 = scalar_lea.vmem [#allocation0], 32
    %19 = vst [vmem:[%s18] sm:%s3] %v17
    %s20 = scalar_lea.vmem %s0, 6
    %v21 = vld [vmem:[%s20] sm:%s3]
    %s22 = scalar_lea.vmem [#allocation0], 24
    %23 = vst [vmem:[%s22] sm:%s3] %v21
    %s24 = scalar_lea.vmem %s0, 4
    %v25 = vld [vmem:[%s24] sm:%s3]
    %s26 = scalar_lea.vmem [#allocation0], 16
    %27 = vst [vmem:[%s26] sm:%s3] %v25
    %s28 = scalar_lea.vmem %s0, 2
    %v29 = vld [vmem:[%s28] sm:%s3]
    %s30 = scalar_lea.vmem [#allocation0], 8
    %31 = vst [vmem:[%s30] sm:%s3] %v29
    %v32 = vld [vmem:[%s0] sm:%s3]
    %33 = vst [vmem:[#allocation0] sm:%s3] %v32
    %v34 = vld [vmem:[#allocation0] ss:$8 sm:$0xf]
    %v35 = vld [vmem:[#allocation0] ss:$8 sm:$0xf0]
    %vm36 = vcmask 1047556
    %v37 = vsel %vm36, %v35, %v34
    %vm38 = vcmask 130048
    %39 = vst.msk [vmem:[%s1] sm:$0xff] %vm38, %v37
    %s40 = scalar_lea.vmem [#allocation0], 1
    %v41 = vld [vmem:[%s40] ss:$8 sm:$0xf]
    %s42 = scalar_lea.vmem [#allocation0], 1
    %v43 = vld [vmem:[%s42] ss:$8 sm:$0xf0]
    %vm44 = vcmask 1047556
    %v45 = vsel %vm44, %v43, %v41
    %46 = vrot.lane.b32.xlu0 %v45, 16
    %v47 = vpop.permute.xlu0 %46
    %vm48 = vcmask 261248
    %49 = vst.msk [vmem:[%s1] sm:$0xff] %vm48, %v47

// kernel: mul.91
$region0: #{mul.91}
  %s0 = inlined_call_operand.vmem [shape: f32[2,16], index: 0, kind: input, shape index: {}]
  %s1 = inlined_call_operand.vmem [shape: f32[32], index: 1, kind: output, shape index: {}]
  $region1: #{mul.91} parent=0
    #allocation0 [shape = 'u8[4096]{0}', space=vmem, size = 0x1000, scoped, tag = 'scoped mem for output reshape']
    #allocation1 [shape = 'u8[4096]{0}', space=vmem, size = 0x1000, scoped, tag = 'scoped mem for input reshape']
    %s3 = ssub.s32 4, 1
    %v4 = vld [vmem:[%s0] sm:%s3]
    %5 = vst [vmem:[#allocation1] sm:%s3] %v4
    %v6 = vld [vmem:[#allocation1] sm:$0x1]
    %vm7 = vcmask 130048
    %8 = vst.msk [vmem:[#allocation0] sm:$0x1] %vm7, %v6
    %s9 = scalar_lea.vmem [#allocation1], 1
    %v10 = vld [vmem:[%s9] sm:$0x1]
    %11 = vrot.lane.b32.xlu0 %v10, 16
    %v12 = vpop.permute.xlu0 %11
    %vm13 = vcmask 261248
    %14 = vst.msk [vmem:[#allocation0] sm:$0x1] %vm13, %v12
    %s16 = ssub.s32 2, 1
    %v17 = vld [vmem:[#allocation0] sm:%s16]
    %s19 = ssub.s32 2, 1
    %20 = vst [vmem:[%s1] sm:%s19] %v17

// kernel: chameleon_attention_forward.1
$region0: #{chameleon_attention_forward.1}
  #allocation0 [shape = 'u32[]', space=smem, size = 0x4, offset = 0x4, fixed_abs, tag = 'smem constant byte address 0x4 - core index']
  #allocation1 [shape = 'u32[72,128]{1,0:T(1,128)}', space=vmem, size = 0x9000, scoped, tag = 'internal scratch']
  %s0 = inlined_call_operand.vmem [shape: f32[8,64], index: 0, kind: input, shape index: {}]
  %s1 = inlined_call_operand.vmem [shape: f32[64,128], index: 1, kind: input, shape index: {}]
  %s2 = inlined_call_operand.vmem [shape: f32[64,64], index: 2, kind: input, shape index: {}]
  %s3 = inlined_call_operand.vmem [shape: f32[8,96], index: 3, kind: input, shape index: {}]
  %s4 = inlined_call_operand.vmem [shape: f32[8,96], index: 4, kind: input, shape index: {}]
  %s5 = inlined_call_operand.vmem [shape: f32[8,96], index: 5, kind: input, shape index: {}]
  %s6 = inlined_call_operand.vmem [shape: f32[96,96], index: 6, kind: input, shape index: {}]
  %s7 = inlined_call_operand.vmem [shape: f32[96,96], index: 7, kind: input, shape index: {}]
  %s8 = inlined_call_operand.hbm [shape: f32[8,64], index: 8, kind: output, shape index: {}]
  %s9 = sld [smem:[#allocation0]]
  $region42: #{chameleon_attention_forward.1} parent=0
    _
  %s11 = ssub.s32 1, %s9
  %s12 = scalar_select 0, %s11, %s9
  $region1: #{chameleon_attention_forward.1} parent=0
    #allocation2 [shape = 'u8[4096]{0}', space=vmem, size = 0x1000, scoped, tag = 'output window, operand 0, single buffered']
    #allocation3 [shape = 's32[1]{0}', space=sflag, size = 0x4, scoped, tag = 'scoped memory for chameleon_attention_forward.1']
    %13 = vsyncpa [#allocation3], 0
    // Predicated region
    $region2: #{chameleon_attention_forward.1} parent=1 // pred_check
      _
    $region3: #{chameleon_attention_forward.1} parent=1 // pred_check_branch
      %15 = sbr.rel (0) target = $region5
    $region4: #{chameleon_attention_forward.1} parent=1 // pred_region
      _
    $region5: #{chameleon_attention_forward.1} parent=1 // pred_fallthru
      _
    // Predicated region
    $region6: #{chameleon_attention_forward.1} parent=1 // pred_check
      _
    $region7: #{chameleon_attention_forward.1} parent=1 // pred_check_branch
      %17 = sbr.rel (0) target = $region9
    $region8: #{chameleon_attention_forward.1} parent=1 // pred_region
      _
    $region9: #{chameleon_attention_forward.1} parent=1 // pred_fallthru
      _
    // Predicated region
    $region10: #{chameleon_attention_forward.1} parent=1 // pred_check
      _
    $region11: #{chameleon_attention_forward.1} parent=1 // pred_check_branch
      %19 = sbr.rel (0) target = $region13
    $region12: #{chameleon_attention_forward.1} parent=1 // pred_region
      _
    $region13: #{chameleon_attention_forward.1} parent=1 // pred_fallthru
      _
    // Predicated region
    $region14: #{chameleon_attention_forward.1} parent=1 // pred_check
      _
    $region15: #{chameleon_attention_forward.1} parent=1 // pred_check_branch
      %21 = sbr.rel (0) target = $region17
    $region16: #{chameleon_attention_forward.1} parent=1 // pred_region
      _
    $region17: #{chameleon_attention_forward.1} parent=1 // pred_fallthru
      _
    // Predicated region
    $region18: #{chameleon_attention_forward.1} parent=1 // pred_check
      _
    $region19: #{chameleon_attention_forward.1} parent=1 // pred_check_branch
      %23 = sbr.rel (0) target = $region21
    $region20: #{chameleon_attention_forward.1} parent=1 // pred_region
      _
    $region21: #{chameleon_attention_forward.1} parent=1 // pred_fallthru
      _
    // Predicated region
    $region22: #{chameleon_attention_forward.1} parent=1 // pred_check
      _
    $region23: #{chameleon_attention_forward.1} parent=1 // pred_check_branch
      %25 = sbr.rel (0) target = $region25
    $region24: #{chameleon_attention_forward.1} parent=1 // pred_region
      _
    $region25: #{chameleon_attention_forward.1} parent=1 // pred_fallthru
      _
    // Predicated region
    $region26: #{chameleon_attention_forward.1} parent=1 // pred_check
      _
    $region27: #{chameleon_attention_forward.1} parent=1 // pred_check_branch
      %27 = sbr.rel (0) target = $region29
    $region28: #{chameleon_attention_forward.1} parent=1 // pred_region
      _
    $region29: #{chameleon_attention_forward.1} parent=1 // pred_fallthru
      _
    // Predicated region
    $region30: #{chameleon_attention_forward.1} parent=1 // pred_check
      _
    $region31: #{chameleon_attention_forward.1} parent=1 // pred_check_branch
      %29 = sbr.rel (0) target = $region33
    $region32: #{chameleon_attention_forward.1} parent=1 // pred_region
      _
    $region33: #{chameleon_attention_forward.1} parent=1 // pred_fallthru
      _
    %v30 = vld [vmem:[%s0] sm:$0xff]
    %v31 = vld [vmem:[%s1] sm:$0xff]
    %v32 = vld [vmem:[%s1 + $0x8] sm:$0xff]
    %v33 = vld [vmem:[%s1 + $0x10] sm:$0xff]
    %v34 = vld [vmem:[%s1 + $0x18] sm:$0xff]
    %v35 = vld [vmem:[%s1 + $0x20] sm:$0xff]
    %v36 = vld [vmem:[%s1 + $0x28] sm:$0xff]
    %v37 = vld [vmem:[%s1 + $0x30] sm:$0xff]
    %v38 = vld [vmem:[%s1 + $0x38] sm:$0xff]
    %vm39 = vcmask 523264
    %v41 = vsel %vm39, %v30, 0
    %43 = vmatpush.msra.mxu0 0.0
    %44 = vmatpush.msra.mxu0 0.0
    %45 = vmatpush.msra.mxu0 0.0
    %46 = vmatpush.msra.mxu0 0.0
    %47 = vmatpush.msra.mxu0 0.0
    %48 = vmatpush.msra.mxu0 0.0
    %49 = vmatpush.msra.mxu0 0.0
    %50 = vmatpush.msra.mxu0 0.0
    %51 = vmatpush.msra.mxu0 %v38
    %52 = vmatpush.msra.mxu0 %v37
    %53 = vmatpush.msra.mxu0 %v36
    %54 = vmatpush.msra.mxu0 %v35
    %55 = vmatpush.msra.mxu0 %v34
    %56 = vmatpush.msra.mxu0 %v33
    %57 = vmatpush.msra.mxu0 %v32
    %58 = vmatpush.msra.mxu0 %v31
    %59 = vmatmul.f32.gmra.mxu0 %v41
    %v60 = vpop.f32.mrf.mxu0
    %v61 = vadd.f32 0.0, %v60
    %62 = vdwg.mxu0
    %v63 = vld [vmem:[%s6] sm:$0xff]
    %v64 = vld [vmem:[%s6 + $0x8] sm:$0xff]
    %v65 = vld [vmem:[%s6 + $0x10] sm:$0xff]
    %v66 = vld [vmem:[%s6 + $0x18] sm:$0xff]
    %v67 = vld [vmem:[%s6 + $0x20] sm:$0xff]
    %v68 = vld [vmem:[%s6 + $0x28] sm:$0xff]
    %v69 = vld [vmem:[%s6 + $0x30] sm:$0xff]
    %v70 = vld [vmem:[%s6 + $0x38] sm:$0xff]
    %v71 = vld [vmem:[%s6 + $0x40] sm:$0xff]
    %v72 = vld [vmem:[%s6 + $0x48] sm:$0xff]
    %v73 = vld [vmem:[%s6 + $0x50] sm:$0xff]
    %v74 = vld [vmem:[%s6 + $0x58] sm:$0xff]
    %vm75 = vcmask 785408
    %v77 = vsel %vm75, %v61, 0
    %79 = vmatpush.msra.mxu0 0.0
    %80 = vmatpush.msra.mxu0 0.0
    %81 = vmatpush.msra.mxu0 0.0
    %82 = vmatpush.msra.mxu0 0.0
    %83 = vmatpush.msra.mxu0 %v74
    %84 = vmatpush.msra.mxu0 %v73
    %85 = vmatpush.msra.mxu0 %v72
    %86 = vmatpush.msra.mxu0 %v71
    %87 = vmatpush.msra.mxu0 %v70
    %88 = vmatpush.msra.mxu0 %v69
    %89 = vmatpush.msra.mxu0 %v68
    %90 = vmatpush.msra.mxu0 %v67
    %91 = vmatpush.msra.mxu0 %v66
    %92 = vmatpush.msra.mxu0 %v65
    %93 = vmatpush.msra.mxu0 %v64
    %94 = vmatpush.msra.mxu0 %v63
    %95 = vmatmul.f32.gmra.mxu0 %v77
    %v96 = vpop.f32.mrf.mxu0
    %v97 = vadd.f32 0.0, %v96
    %98 = vdwg.mxu0
    %v99 = vsub.f32 %v61, %v97
    %v100 = vmul.f32 %v99, %v99
    %v102 = vsel %vm75, %v100, 0
    %104 = vmatpush.msra.mxu0 0.0
    %105 = vmatpush.msra.mxu0 0.0
    %106 = vmatpush.msra.mxu0 0.0
    %107 = vmatpush.msra.mxu0 0.0
    %108 = vmatpush.msra.mxu0 %v74
    %109 = vmatpush.msra.mxu0 %v73
    %110 = vmatpush.msra.mxu0 %v72
    %111 = vmatpush.msra.mxu0 %v71
    %112 = vmatpush.msra.mxu0 %v70
    %113 = vmatpush.msra.mxu0 %v69
    %114 = vmatpush.msra.mxu0 %v68
    %115 = vmatpush.msra.mxu0 %v67
    %116 = vmatpush.msra.mxu0 %v66
    %117 = vmatpush.msra.mxu0 %v65
    %118 = vmatpush.msra.mxu0 %v64
    %119 = vmatpush.msra.mxu0 %v63
    %120 = vmatmul.f32.gmra.mxu0 %v102
    %v121 = vpop.f32.mrf.mxu0
    %v122 = vadd.f32 1e-05, %v121
    %123 = vdwg.mxu0
    %v124 = vrsqrt.pop %v122
    %v125 = vmul.f32 %v124, %v122
    %v126 = vmul.f32 %v125, %v124
    %v127 = vmul.f32 0.5, %v126
    %v128 = vsub.f32 1.5, %v127
    %v129 = vmul.f32 %v124, %v128
    %vm130 = vweird.f32 %v122
    %vm131 = vweird.f32 %v124
    %vm132 = vmor %vm130, %vm131
    %v133 = vsel %vm132, %v124, %v129
    %v134 = vmul.f32 %v99, %v133
    %v135 = vld [vmem:[%s7] sm:$0xff]
    %v136 = vld [vmem:[%s7 + $0x8] sm:$0xff]
    %v137 = vld [vmem:[%s7 + $0x10] sm:$0xff]
    %v138 = vld [vmem:[%s7 + $0x18] sm:$0xff]
    %v139 = vld [vmem:[%s7 + $0x20] sm:$0xff]
    %v140 = vld [vmem:[%s7 + $0x28] sm:$0xff]
    %v141 = vld [vmem:[%s7 + $0x30] sm:$0xff]
    %v142 = vld [vmem:[%s7 + $0x38] sm:$0xff]
    %v143 = vld [vmem:[%s7 + $0x40] sm:$0xff]
    %v144 = vld [vmem:[%s7 + $0x48] sm:$0xff]
    %v145 = vld [vmem:[%s7 + $0x50] sm:$0xff]
    %v146 = vld [vmem:[%s7 + $0x58] sm:$0xff]
    %v148 = vsel %vm75, %v134, 0
    %150 = vmatpush.msra.mxu0 0.0
    %151 = vmatpush.msra.mxu0 0.0
    %152 = vmatpush.msra.mxu0 0.0
    %153 = vmatpush.msra.mxu0 0.0
    %154 = vmatpush.msra.mxu0 %v146
    %155 = vmatpush.msra.mxu0 %v145
    %156 = vmatpush.msra.mxu0 %v144
    %157 = vmatpush.msra.mxu0 %v143
    %158 = vmatpush.msra.mxu0 %v142
    %159 = vmatpush.msra.mxu0 %v141
    %160 = vmatpush.msra.mxu0 %v140
    %161 = vmatpush.msra.mxu0 %v139
    %162 = vmatpush.msra.mxu0 %v138
    %163 = vmatpush.msra.mxu0 %v137
    %164 = vmatpush.msra.mxu0 %v136
    %165 = vmatpush.msra.mxu0 %v135
    %166 = vmatmul.f32.gmra.mxu0 %v148
    %v167 = vpop.f32.mrf.mxu0
    %v168 = vadd.f32 0.0, %v167
    %169 = vdwg.mxu0
    %v170 = vld [vmem:[%s3] sm:$0xff]
    %v171 = vmul.f32 %v134, %v170
    %v172 = vld [vmem:[%s4] sm:$0xff]
    %v173 = vmul.f32 %v168, %v172
    %v174 = vadd.f32 %v171, %v173
    %v175 = vld [vmem:[%s5] sm:$0xff]
    %v176 = vadd.f32 %v174, %v175
    %v177 = vlaneseq
    %v178 = vshrl.u32 %v177, 7
    %v179 = vlaneseq
    %v180 = vand.u32 %v179, 127
    %vm181 = vcmp.le.s32.totalorder %v180, %v178
    %v182 = vld [vmem:[%s2] sm:$0xff]
    %v183 = vld [vmem:[%s2 + $0x8] sm:$0xff]
    %v184 = vld [vmem:[%s2 + $0x10] sm:$0xff]
    %v185 = vld [vmem:[%s2 + $0x18] sm:$0xff]
    %v186 = vld [vmem:[%s2 + $0x20] sm:$0xff]
    %v187 = vld [vmem:[%s2 + $0x28] sm:$0xff]
    %v188 = vld [vmem:[%s2 + $0x30] sm:$0xff]
    %v189 = vld [vmem:[%s2 + $0x38] sm:$0xff]
    %191 = vrot.lane.b32.xlu0 %v176, 64
    %v192 = vpop.permute.xlu0 %191
    %vm193 = vcmask 130048
    %v194 = vsel %vm193, %v176, 0
    %v196 = vsel %vm193, %v192, 0
    %198 = vmatpush.xpose.msra.mxu0 0.0
    %199 = vmatpush.xpose.msra.mxu0 0.0
    %200 = vmatpush.xpose.msra.mxu0 0.0
    %201 = vmatpush.xpose.msra.mxu0 0.0
    %202 = vmatpush.xpose.msra.mxu0 0.0
    %203 = vmatpush.xpose.msra.mxu0 0.0
    %204 = vmatpush.xpose.msra.mxu0 0.0
    %205 = vmatpush.xpose.msra.mxu0 0.0
    %206 = vmatpush.xpose.msra.mxu0 0.0
    %207 = vmatpush.xpose.msra.mxu0 0.0
    %208 = vmatpush.xpose.msra.mxu0 0.0
    %209 = vmatpush.xpose.msra.mxu0 0.0
    %210 = vmatpush.xpose.msra.mxu0 0.0
    %211 = vmatpush.xpose.msra.mxu0 0.0
    %212 = vmatpush.xpose.msra.mxu0 0.0
    %213 = vmatpush.xpose.msra.mxu0 %v196
    %214 = vmatmul.f32.gmra.mxu0 %v194
    %v215 = vpop.f32.mrf.mxu0
    %v216 = vadd.f32 0.0, %v215
    %217 = vdwg.mxu0
    %v218 = vsel %vm181, %v216, -1e+30
    %vm219 = vcmask 64512
    %v220 = vsel %vm219, %v218, -inf
    %221 = vmax.xlane.f32.xlu0 %v220
    %v222 = vpop.xlane.xlu0 %221
    %v223 = vsub.f32 %v218, %v222
    %v224 = vmul.f32 %v223, 1.442695
    %v225 = vpow.pop %v224
    %v226 = vsel %vm219, %v225, 0.0
    %227 = vadd.xlane.f32.xlu0 %v226
    %v228 = vpop.xlane.xlu0 %227
    %229 = vrot.lane.b32.xlu0 %v61, 32
    %v230 = vpop.permute.xlu0 %229
    %v233 = vsel %vm219, %v225, 0
    %235 = vmatpush.msra.mxu0 0.0
    %236 = vmatpush.msra.mxu0 0.0
    %237 = vmatpush.msra.mxu0 0.0
    %238 = vmatpush.msra.mxu0 0.0
    %239 = vmatpush.msra.mxu0 0.0
    %240 = vmatpush.msra.mxu0 0.0
    %241 = vmatpush.msra.mxu0 0.0
    %242 = vmatpush.msra.mxu0 0.0
    %243 = vmatpush.msra.mxu0 0.0
    %244 = vmatpush.msra.mxu0 0.0
    %245 = vmatpush.msra.mxu0 0.0
    %246 = vmatpush.msra.mxu0 0.0
    %247 = vmatpush.msra.mxu0 0.0
    %248 = vmatpush.msra.mxu0 0.0
    %249 = vmatpush.msra.mxu0 0.0
    %250 = vmatpush.msra.mxu0 %v230
    %251 = vmatmul.f32.gmra.mxu0 %v233
    %v252 = vpop.f32.mrf.mxu0
    %v253 = vadd.f32 0.0, %v252
    %254 = vdwg.mxu0
    %v255 = vrcp.pop %v228
    %v256 = vmul.f32 %v253, %v255
    %257 = vrot.lane.b32.xlu0 %v176, 112
    %v258 = vpop.permute.xlu0 %257
    %v259 = vsel %vm193, %v258, 0
    %261 = vmatpush.xpose.msra.mxu0 0.0
    %262 = vmatpush.xpose.msra.mxu0 0.0
    %263 = vmatpush.xpose.msra.mxu0 0.0
    %264 = vmatpush.xpose.msra.mxu0 0.0
    %265 = vmatpush.xpose.msra.mxu0 0.0
    %266 = vmatpush.xpose.msra.mxu0 0.0
    %267 = vmatpush.xpose.msra.mxu0 0.0
    %268 = vmatpush.xpose.msra.mxu0 0.0
    %269 = vmatpush.xpose.msra.mxu0 0.0
    %270 = vmatpush.xpose.msra.mxu0 0.0
    %271 = vmatpush.xpose.msra.mxu0 0.0
    %272 = vmatpush.xpose.msra.mxu0 0.0
    %273 = vmatpush.xpose.msra.mxu0 0.0
    %274 = vmatpush.xpose.msra.mxu0 0.0
    %275 = vmatpush.xpose.msra.mxu0 0.0
    %276 = vmatpush.xpose.msra.mxu0 %v196
    %277 = vmatmul.f32.gmra.mxu0 %v259
    %v278 = vpop.f32.mrf.mxu0
    %v279 = vadd.f32 0.0, %v278
    %280 = vdwg.mxu0
    %v281 = vsel %vm181, %v279, -1e+30
    %v282 = vsel %vm219, %v281, -inf
    %283 = vmax.xlane.f32.xlu0 %v282
    %v284 = vpop.xlane.xlu0 %283
    %v285 = vsub.f32 %v281, %v284
    %v286 = vmul.f32 %v285, 1.442695
    %v287 = vpow.pop %v286
    %v288 = vsel %vm219, %v287, 0.0
    %289 = vadd.xlane.f32.xlu0 %v288
    %v290 = vpop.xlane.xlu0 %289
    %v292 = vsel %vm219, %v287, 0
    %294 = vmatpush.msra.mxu0 0.0
    %295 = vmatpush.msra.mxu0 0.0
    %296 = vmatpush.msra.mxu0 0.0
    %297 = vmatpush.msra.mxu0 0.0
    %298 = vmatpush.msra.mxu0 0.0
    %299 = vmatpush.msra.mxu0 0.0
    %300 = vmatpush.msra.mxu0 0.0
    %301 = vmatpush.msra.mxu0 0.0
    %302 = vmatpush.msra.mxu0 0.0
    %303 = vmatpush.msra.mxu0 0.0
    %304 = vmatpush.msra.mxu0 0.0
    %305 = vmatpush.msra.mxu0 0.0
    %306 = vmatpush.msra.mxu0 0.0
    %307 = vmatpush.msra.mxu0 0.0
    %308 = vmatpush.msra.mxu0 0.0
    %309 = vmatpush.msra.mxu0 %v230
    %310 = vmatmul.f32.gmra.mxu0 %v292
    %v311 = vpop.f32.mrf.mxu0
    %v312 = vadd.f32 0.0, %v311
    %313 = vdwg.mxu0
    %v314 = vrcp.pop %v290
    %v315 = vmul.f32 %v312, %v314
    %v317 = vsel %vm193, %v315, 0
    %319 = vmatpush.msra.mxu0 0.0
    %320 = vmatpush.msra.mxu0 0.0
    %321 = vmatpush.msra.mxu0 0.0
    %322 = vmatpush.msra.mxu0 0.0
    %323 = vmatpush.msra.mxu0 0.0
    %324 = vmatpush.msra.mxu0 0.0
    %325 = vmatpush.msra.mxu0 0.0
    %326 = vmatpush.msra.mxu0 0.0
    %327 = vmatpush.msra.mxu0 0.0
    %328 = vmatpush.msra.mxu0 0.0
    %329 = vmatpush.msra.mxu0 0.0
    %330 = vmatpush.msra.mxu0 0.0
    %331 = vmatpush.msra.mxu0 0.0
    %332 = vmatpush.msra.mxu0 0.0
    %333 = vmatpush.msra.mxu0 %v185
    %334 = vmatpush.msra.mxu0 %v184
    %335 = vmatmul.f32.gmra.mxu0 %v317
    %v336 = vpop.f32.mrf.mxu0
    %v337 = vadd.f32 0.0, %v336
    %338 = vdwg.mxu0
    %v340 = vsel %vm193, %v256, 0
    %342 = vmatpush.msra.mxu0 0.0
    %343 = vmatpush.msra.mxu0 0.0
    %344 = vmatpush.msra.mxu0 0.0
    %345 = vmatpush.msra.mxu0 0.0
    %346 = vmatpush.msra.mxu0 0.0
    %347 = vmatpush.msra.mxu0 0.0
    %348 = vmatpush.msra.mxu0 0.0
    %349 = vmatpush.msra.mxu0 0.0
    %350 = vmatpush.msra.mxu0 0.0
    %351 = vmatpush.msra.mxu0 0.0
    %352 = vmatpush.msra.mxu0 0.0
    %353 = vmatpush.msra.mxu0 0.0
    %354 = vmatpush.msra.mxu0 0.0
    %355 = vmatpush.msra.mxu0 0.0
    %356 = vmatpush.msra.mxu0 %v183
    %357 = vmatpush.msra.mxu0 %v182
    %358 = vmatmul.f32.gmra.mxu0 %v340
    %v359 = vpop.f32.mrf.mxu0
    %v360 = vadd.f32 %v337, %v359
    %361 = vdwg.mxu0
    %362 = vrot.lane.b32.xlu0 %v176, 96
    %v363 = vpop.permute.xlu0 %362
    %364 = vrot.lane.b32.xlu0 %v176, 48
    %v365 = vpop.permute.xlu0 %364
    %v366 = vsel %vm193, %v363, 0
    %v368 = vsel %vm193, %v365, 0
    %370 = vmatpush.xpose.msra.mxu0 0.0
    %371 = vmatpush.xpose.msra.mxu0 0.0
    %372 = vmatpush.xpose.msra.mxu0 0.0
    %373 = vmatpush.xpose.msra.mxu0 0.0
    %374 = vmatpush.xpose.msra.mxu0 0.0
    %375 = vmatpush.xpose.msra.mxu0 0.0
    %376 = vmatpush.xpose.msra.mxu0 0.0
    %377 = vmatpush.xpose.msra.mxu0 0.0
    %378 = vmatpush.xpose.msra.mxu0 0.0
    %379 = vmatpush.xpose.msra.mxu0 0.0
    %380 = vmatpush.xpose.msra.mxu0 0.0
    %381 = vmatpush.xpose.msra.mxu0 0.0
    %382 = vmatpush.xpose.msra.mxu0 0.0
    %383 = vmatpush.xpose.msra.mxu0 0.0
    %384 = vmatpush.xpose.msra.mxu0 0.0
    %385 = vmatpush.xpose.msra.mxu0 %v368
    %386 = vmatmul.f32.gmra.mxu0 %v366
    %v387 = vpop.f32.mrf.mxu0
    %v388 = vadd.f32 0.0, %v387
    %389 = vdwg.mxu0
    %v390 = vsel %vm181, %v388, -1e+30
    %v391 = vsel %vm219, %v390, -inf
    %392 = vmax.xlane.f32.xlu0 %v391
    %v393 = vpop.xlane.xlu0 %392
    %v394 = vsub.f32 %v390, %v393
    %v395 = vmul.f32 %v394, 1.442695
    %v396 = vpow.pop %v395
    %v397 = vsel %vm219, %v396, 0.0
    %398 = vadd.xlane.f32.xlu0 %v397
    %v399 = vpop.xlane.xlu0 %398
    %400 = vrot.lane.b32.xlu0 %v61, 16
    %v401 = vpop.permute.xlu0 %400
    %v404 = vsel %vm219, %v396, 0
    %406 = vmatpush.msra.mxu0 0.0
    %407 = vmatpush.msra.mxu0 0.0
    %408 = vmatpush.msra.mxu0 0.0
    %409 = vmatpush.msra.mxu0 0.0
    %410 = vmatpush.msra.mxu0 0.0
    %411 = vmatpush.msra.mxu0 0.0
    %412 = vmatpush.msra.mxu0 0.0
    %413 = vmatpush.msra.mxu0 0.0
    %414 = vmatpush.msra.mxu0 0.0
    %415 = vmatpush.msra.mxu0 0.0
    %416 = vmatpush.msra.mxu0 0.0
    %417 = vmatpush.msra.mxu0 0.0
    %418 = vmatpush.msra.mxu0 0.0
    %419 = vmatpush.msra.mxu0 0.0
    %420 = vmatpush.msra.mxu0 0.0
    %421 = vmatpush.msra.mxu0 %v401
    %422 = vmatmul.f32.gmra.mxu0 %v404
    %v423 = vpop.f32.mrf.mxu0
    %v424 = vadd.f32 0.0, %v423
    %425 = vdwg.mxu0
    %v426 = vrcp.pop %v399
    %v427 = vmul.f32 %v424, %v426
    %v429 = vsel %vm193, %v427, 0
    %431 = vmatpush.msra.mxu0 0.0
    %432 = vmatpush.msra.mxu0 0.0
    %433 = vmatpush.msra.mxu0 0.0
    %434 = vmatpush.msra.mxu0 0.0
    %435 = vmatpush.msra.mxu0 0.0
    %436 = vmatpush.msra.mxu0 0.0
    %437 = vmatpush.msra.mxu0 0.0
    %438 = vmatpush.msra.mxu0 0.0
    %439 = vmatpush.msra.mxu0 0.0
    %440 = vmatpush.msra.mxu0 0.0
    %441 = vmatpush.msra.mxu0 0.0
    %442 = vmatpush.msra.mxu0 0.0
    %443 = vmatpush.msra.mxu0 0.0
    %444 = vmatpush.msra.mxu0 0.0
    %445 = vmatpush.msra.mxu0 %v187
    %446 = vmatpush.msra.mxu0 %v186
    %447 = vmatmul.f32.gmra.mxu0 %v429
    %v448 = vpop.f32.mrf.mxu0
    %v449 = vadd.f32 0.0, %v448
    %450 = vdwg.mxu0
    %v451 = vadd.f32 %v360, %v449
    %452 = vrot.lane.b32.xlu0 %v176, 80
    %v453 = vpop.permute.xlu0 %452
    %v454 = vsel %vm193, %v453, 0
    %456 = vmatpush.xpose.msra.mxu0 0.0
    %457 = vmatpush.xpose.msra.mxu0 0.0
    %458 = vmatpush.xpose.msra.mxu0 0.0
    %459 = vmatpush.xpose.msra.mxu0 0.0
    %460 = vmatpush.xpose.msra.mxu0 0.0
    %461 = vmatpush.xpose.msra.mxu0 0.0
    %462 = vmatpush.xpose.msra.mxu0 0.0
    %463 = vmatpush.xpose.msra.mxu0 0.0
    %464 = vmatpush.xpose.msra.mxu0 0.0
    %465 = vmatpush.xpose.msra.mxu0 0.0
    %466 = vmatpush.xpose.msra.mxu0 0.0
    %467 = vmatpush.xpose.msra.mxu0 0.0
    %468 = vmatpush.xpose.msra.mxu0 0.0
    %469 = vmatpush.xpose.msra.mxu0 0.0
    %470 = vmatpush.xpose.msra.mxu0 0.0
    %471 = vmatpush.xpose.msra.mxu0 %v368
    %472 = vmatmul.f32.gmra.mxu0 %v454
    %v473 = vpop.f32.mrf.mxu0
    %v474 = vadd.f32 0.0, %v473
    %475 = vdwg.mxu0
    %v476 = vsel %vm181, %v474, -1e+30
    %v477 = vsel %vm219, %v476, -inf
    %478 = vmax.xlane.f32.xlu0 %v477
    %v479 = vpop.xlane.xlu0 %478
    %v480 = vsub.f32 %v476, %v479
    %v481 = vmul.f32 %v480, 1.442695
    %v482 = vpow.pop %v481
    %v483 = vsel %vm219, %v482, 0.0
    %484 = vadd.xlane.f32.xlu0 %v483
    %v485 = vpop.xlane.xlu0 %484
    %v487 = vsel %vm219, %v482, 0
    %489 = vmatpush.msra.mxu0 0.0
    %490 = vmatpush.msra.mxu0 0.0
    %491 = vmatpush.msra.mxu0 0.0
    %492 = vmatpush.msra.mxu0 0.0
    %493 = vmatpush.msra.mxu0 0.0
    %494 = vmatpush.msra.mxu0 0.0
    %495 = vmatpush.msra.mxu0 0.0
    %496 = vmatpush.msra.mxu0 0.0
    %497 = vmatpush.msra.mxu0 0.0
    %498 = vmatpush.msra.mxu0 0.0
    %499 = vmatpush.msra.mxu0 0.0
    %500 = vmatpush.msra.mxu0 0.0
    %501 = vmatpush.msra.mxu0 0.0
    %502 = vmatpush.msra.mxu0 0.0
    %503 = vmatpush.msra.mxu0 0.0
    %504 = vmatpush.msra.mxu0 %v401
    %505 = vmatmul.f32.gmra.mxu0 %v487
    %v506 = vpop.f32.mrf.mxu0
    %v507 = vadd.f32 0.0, %v506
    %508 = vdwg.mxu0
    %v509 = vrcp.pop %v485
    %v510 = vmul.f32 %v507, %v509
    %v512 = vsel %vm193, %v510, 0
    %514 = vmatpush.msra.mxu0 0.0
    %515 = vmatpush.msra.mxu0 0.0
    %516 = vmatpush.msra.mxu0 0.0
    %517 = vmatpush.msra.mxu0 0.0
    %518 = vmatpush.msra.mxu0 0.0
    %519 = vmatpush.msra.mxu0 0.0
    %520 = vmatpush.msra.mxu0 0.0
    %521 = vmatpush.msra.mxu0 0.0
    %522 = vmatpush.msra.mxu0 0.0
    %523 = vmatpush.msra.mxu0 0.0
    %524 = vmatpush.msra.mxu0 0.0
    %525 = vmatpush.msra.mxu0 0.0
    %526 = vmatpush.msra.mxu0 0.0
    %527 = vmatpush.msra.mxu0 0.0
    %528 = vmatpush.msra.mxu0 %v189
    %529 = vmatpush.msra.mxu0 %v188
    %530 = vmatmul.f32.gmra.mxu0 %v512
    %v531 = vpop.f32.mrf.mxu0
    %v532 = vadd.f32 0.0, %v531
    %533 = vdwg.mxu0
    %v534 = vadd.f32 %v451, %v532
    %535 = vst.msk [vmem:[#allocation2] sm:$0xff] %vm39, %v534
    // Predicated region
    $region34: #{chameleon_attention_forward.1} parent=1 // pred_check
      _
    $region35: #{chameleon_attention_forward.1} parent=1 // pred_check_branch
      %537 = sbr.rel (0) target = $region37
    $region36: #{chameleon_attention_forward.1} parent=1 // pred_region
      %539 = vsyncadd [#allocation3], 0
      %s541 = sshll.u32 [#allocation2], 4
      %s542 = int_to_ptr.vmem [resolvable:$true] %s541
      %s543 = sshll.u32 %s8, 4
      %s544 = int_to_ptr.hbm [resolvable:$true] %s543
      %546 = dma.vmem_to_hbm [thread:$0]  %s542, 128, %s544, [#allocation3]
    $region37: #{chameleon_attention_forward.1} parent=1 // pred_fallthru
      _
    // Predicated region
    $region38: #{chameleon_attention_forward.1} parent=1 // pred_check
      _
    $region39: #{chameleon_attention_forward.1} parent=1 // pred_check_branch
      %548 = sbr.rel (0) target = $region41
    $region40: #{chameleon_attention_forward.1} parent=1 // pred_region
      %550 = dma.done [#allocation3], 128
    $region41: #{chameleon_attention_forward.1} parent=1 // pred_fallthru
      _
    %551 = vsyncpa [#allocation3], 1

</llo_original>
